<compile_context>
chip_gen: v5e
topology: v5e:2x2
jax: 0.10.0
libtpu: 0.0.40
codegen_flags: <defaults>
</compile_context>

<pallas_src>
import jax
import jax.numpy as jnp
from jax.experimental import pallas as pl
from jax.experimental.pallas import tpu as pltpu


def _netlin_kernel(w_ref, x_ref, o_ref):
    # w_ref: (1, C, 1)    per-channel scale (out_dtype), resident every step
    # x_ref: (1, C, THW)  one spatial tile of one batch element (native dtype)
    # o_ref: (1, C, THW)  out_dtype
    # Cast the activation tile to the promoted dtype *inside* the kernel so the
    # multiply happens in the promoted precision (matches torch promotion).
    o_ref[...] = w_ref[...] * x_ref[...].astype(o_ref.dtype)


def netlin_layer(
    x_nchw: jax.Array,
    weight: jax.Array,
    *,
    min_pallas_bytes: int = 256 * 1024,
) -> jax.Array:
    """out = weight * x  with weight (1, C, 1, 1) and x (N, C, H, W)."""
    n, c, h, w = x_nchw.shape
    hw = h * w

    # Match PyTorch type promotion (e.g. f32 weight * bf16 input -> f32 out).
    out_dtype = jnp.result_type(x_nchw.dtype, weight.dtype)
    in_itemsize = jnp.dtype(x_nchw.dtype).itemsize
    out_itemsize = jnp.dtype(out_dtype).itemsize
    max_itemsize = max(in_itemsize, out_itemsize)

    # Short-circuit tiny tensors: pallas_call launch + per-step overhead
    # dominates sub-microsecond work; plain XLA fuses this trivially.
    if n * c * hw * max_itemsize < min_pallas_bytes:
        return (weight * x_nchw.astype(out_dtype)).astype(out_dtype)

    # Free (no-copy) reshapes; NO dtype cast of x in the wrapper.
    x_flat = x_nchw.reshape(n, c, hw)
    w_flat = weight.reshape(1, c, 1).astype(out_dtype)   # tiny

    # Spatial tile: multiple of 128 lanes (or the full HW extent), sized so one
    # block is ~<= 6 MiB at the larger itemsize.  Double-buffered in + out
    # blocks then total ~<= 24 MiB -> fits every generation including v7x's
    # 64 MiB physical VMEM, with headroom for Mosaic internal scratch.
    target_block_bytes = 6 * 1024 * 1024
    thw = (target_block_bytes // max(1, c * max_itemsize)) // 128 * 128
    thw = max(128, thw)
    if thw >= hw:
        # Single full-extent tile (block dim == array dim is always legal,
        # even when hw is not a multiple of 128).
        thw = hw
    # Megacore (v7x) load balance: with N == 1 make sure there are >= 2 grid
    # points so both TensorCores get work.
    if n == 1 and thw == hw and hw > 128:
        thw = max(128, ((pl.cdiv(hw, 2) + 127) // 128) * 128)

    grid = (n, pl.cdiv(hw, thw))

    cost = pl.CostEstimate(
        flops=n * c * hw,
        transcendentals=0,
        bytes_accessed=n * c * hw * (in_itemsize + out_itemsize)
        + c * out_itemsize,
    )

    out_flat = pl.pallas_call(
        _netlin_kernel,
        out_shape=jax.ShapeDtypeStruct((n, c, hw), out_dtype),
        grid_spec=pltpu.PrefetchScalarGridSpec(
            num_scalar_prefetch=0,
            grid=grid,
            in_specs=[
                # weight: full (1, C, 1) block, same (resident) block each step
                pl.BlockSpec((1, c, 1), lambda i, j: (0, 0, 0)),
                # x: one spatial tile of one batch element per step
                pl.BlockSpec((1, c, thw), lambda i, j: (i, 0, j)),
            ],
            out_specs=pl.BlockSpec((1, c, thw), lambda i, j: (i, 0, j)),
        ),
        compiler_params=pltpu.CompilerParams(
            dimension_semantics=("parallel", "parallel"),
            vmem_limit_bytes=48 << 20,
        ),
        cost_estimate=cost,
    )(w_flat, x_flat)

    return out_flat.reshape(n, c, h, w)


if __name__ == "__main__":
    key = jax.random.PRNGKey(0)
    k_x, k_w = jax.random.split(key)

    N, C, H, W = 2, 4, 16, 16
    x = jax.random.normal(k_x, (N, C, H, W), dtype=jnp.float32)
    # Deterministic synthetic "learnt LPIPS weight", shape (1, C, 1, 1).
    weight = jax.random.uniform(k_w, (1, C, 1, 1), dtype=jnp.float32)

    # 1) Force the Pallas path at the small test shape.
    out = jax.block_until_ready(netlin_layer(x, weight, min_pallas_bytes=0))
    ref = weight * x
    assert out.shape == (N, C, H, W)
    assert out.dtype == ref.dtype
    assert jnp.allclose(out, ref, atol=1e-6, rtol=1e-6)

    # 2) Mixed dtype (f32 weight x bf16 activations): in-kernel cast, f32 out.
    x_bf16 = x.astype(jnp.bfloat16)
    out_mixed = jax.block_until_ready(
        netlin_layer(x_bf16, weight, min_pallas_bytes=0)
    )
    ref_mixed = weight * x_bf16.astype(jnp.float32)
    assert out_mixed.dtype == jnp.float32
    assert jnp.allclose(out_mixed, ref_mixed, atol=1e-6, rtol=1e-6)

    # 3) Non-128-multiple spatial size (late LPIPS stage, 7x7): full-extent
    #    ragged block on the Pallas path, no pad/slice round trips.
    x2 = jax.random.normal(k_x, (N, C, 7, 7), dtype=jnp.float32)
    out2 = jax.block_until_ready(netlin_layer(x2, weight, min_pallas_bytes=0))
    assert jnp.allclose(out2, weight * x2, atol=1e-6, rtol=1e-6)

    # 4) Default short-circuit path for tiny tensors.
    out3 = jax.block_until_ready(netlin_layer(x2, weight))
    assert jnp.allclose(out3, weight * x2, atol=1e-6, rtol=1e-6)

    print("KERNEL_OK")
</pallas_src>

<mosaic_0001>
module attributes {stable_mosaic.version = 11 : i64} {
  func.func @_netlin_kernel(%arg0: i32, %arg1: i32, %arg2: memref<1x4x1xf32, #tpu.memory_space<vmem>>, %arg3: memref<1x4x256xf32, #tpu.memory_space<vmem>>, %arg4: memref<1x4x256xf32, #tpu.memory_space<vmem>>) attributes {dimension_semantics = [#tpu.dimension_semantics<parallel>, #tpu.dimension_semantics<parallel>], iteration_bounds = array<i64: 2, 1>, scalar_prefetch = 0 : i64, scratch_operands = 0 : i64, tpu.core_type = #tpu.core_type<tc>, window_params = [{pipeline_mode = #tpu.pipeline_mode<synchronous>, transform_indices = @transform_0, window_bounds = array<i64: 1, 4, 1>}, {transform_indices = @transform_1, window_bounds = array<i64: 1, 4, 256>}, {transform_indices = @transform_2, window_bounds = array<i64: 1, 4, 256>}]} {
    %c0 = arith.constant 0 : index
    %c0_0 = arith.constant 0 : index
    %c0_1 = arith.constant 0 : index
    %0 = vector.load %arg2[%c0, %c0_0, %c0_1] : memref<1x4x1xf32, #tpu.memory_space<vmem>>, vector<1x4x1xf32>
    %c0_2 = arith.constant 0 : index
    %c0_3 = arith.constant 0 : index
    %c0_4 = arith.constant 0 : index
    %1 = vector.load %arg3[%c0_2, %c0_3, %c0_4] : memref<1x4x256xf32, #tpu.memory_space<vmem>>, vector<1x4x256xf32>
    %2 = vector.broadcast %0 : vector<1x4x1xf32> to vector<1x4x256xf32>
    %3 = arith.mulf %2, %1 : vector<1x4x256xf32>
    %c0_5 = arith.constant 0 : index
    %c0_6 = arith.constant 0 : index
    %c0_7 = arith.constant 0 : index
    %4 = vector.load %arg4[%c0_5, %c0_6, %c0_7] : memref<1x4x256xf32, #tpu.memory_space<vmem>>, vector<1x4x256xf32>
    tpu.vector_store %arg4[%c0_5, %c0_6, %c0_7], %3 {strides = array<i32>} : memref<1x4x256xf32, #tpu.memory_space<vmem>>, vector<1x4x256xf32>,
    return
  }
  func.func @transform_0(%arg0: i32, %arg1: i32) -> (i32, i32, i32) {
    %c0_i32 = arith.constant 0 : i32
    %c0_i32_0 = arith.constant 0 : i32
    %c0_i32_1 = arith.constant 0 : i32
    %c0_i32_2 = arith.constant 0 : i32
    return %c0_i32, %c0_i32_0, %c0_i32_1 : i32, i32, i32
  }
  func.func @transform_1(%arg0: i32, %arg1: i32) -> (i32, i32, i32) {
    %c0_i32 = arith.constant 0 : i32
    %c0_i32_0 = arith.constant 0 : i32
    return %arg0, %c0_i32, %arg1 : i32, i32, i32
  }
  func.func @transform_2(%arg0: i32, %arg1: i32) -> (i32, i32, i32) {
    %c0_i32 = arith.constant 0 : i32
    %c0_i32_0 = arith.constant 0 : i32
    return %arg0, %c0_i32, %arg1 : i32, i32, i32
  }
}

</mosaic_0001>

<llo_original>
// kernel: tpu_custom_call.1
$region0: #{tpu_custom_call.1}
  #allocation0 [shape = 'u32[]', space=smem, size = 0x4, offset = 0x4, fixed_abs, tag = 'smem constant byte address 0x4 - core index']
  #allocation1 [shape = 'u32[72,128]{1,0:T(1,128)}', space=vmem, size = 0x9000, scoped, tag = 'internal scratch']
  %s0 = inlined_call_operand.vmem [shape: f32[1,4,1], index: 0, kind: input, shape index: {}]
  %s1 = inlined_call_operand.hbm [shape: f32[2,4,256], index: 1, kind: input, shape index: {}]
  %s2 = inlined_call_operand.hbm [shape: f32[2,4,256], index: 2, kind: output, shape index: {}]
  %s3 = sld [smem:[#allocation0]]
  $region45: #{tpu_custom_call.1} parent=0
    _
  %s5 = ssub.s32 1, %s3
  %s6 = scalar_select 0, %s5, %s3
  $region1: #{tpu_custom_call.1} parent=0
    #allocation2 [shape = 'u8[8192]{0}', space=vmem, size = 0x2000, scoped, tag = 'input window, operand 1']
    #allocation3 [shape = 's32[2]{0}', space=sflag, size = 0x8, scoped, tag = 'scoped memory for tpu_custom_call.1']
    #allocation4 [shape = 's32[2]{0}', space=sflag, size = 0x8, scoped, tag = 'scoped memory for tpu_custom_call.1']
    #allocation5 [shape = 'u8[8192]{0}', space=vmem, size = 0x2000, scoped, tag = 'output window, operand 0']
    %7 = vsyncpa [#allocation3], 0
    %s8 = scalar_lea.sflag [#allocation3], 1
    %9 = vsyncpa %s8, 0
    %10 = vsyncpa [#allocation4], 0
    %s11 = scalar_lea.sflag [#allocation4], 1
    %12 = vsyncpa %s11, 0
    loop: start=0, step=1, limit=4
    $region2: #{tpu_custom_call.1} parent=1 // loop_pre_header
      _
    $region3: #{tpu_custom_call.1} parent=1 // loop_header
      %s14 = sphi 0, %s18
      %p15 = scmp.ge.s32.totalorder %s14, 4
      %s21 = sphi 0, %s33
      %s22 = sphi 0, %s29
      %s23 = sphi 0, %s21
      %s24 = sphi 0, %s22
      %s25 = sphi 0, %s23
      %s26 = sphi 0, %s24
      %s34 = sphi 0, %s34
      %s36 = sphi 0, %s34
      %s37 = sphi 0, %s36
      %s51 = sphi 0, %s37
      %s59 = sphi 0, %s61
      %s62 = sphi 0, %s59
      %s63 = sphi 0, %s62
      %s79 = sphi 0, %s63
      %s87 = sphi 0, %s89
      %s90 = sphi 0, %s87
      %s91 = sphi 0, %s90
      %s107 = sphi 0, %s91
    $region4: #{tpu_custom_call.1} parent=1 // loop_header_branch
      %17 = sbr.rel (%p15) target = $region8
    $region5: #{tpu_custom_call.1} parent=1 // loop_body
      %s19 = ssub.s32 %s14, 1
      %s20 = ssub.s32 %s14, 2
      %s27 = sadd.s32 1, %s22
      %p28 = scmp.ge.s32.totalorder %s27, 1
      %s29 = scalar_select %p28, 0, %s27
      %s30 = sadd.s32 1, %s21
      %s31 = scalar_select %p28, %s30, %s21
      %p32 = scmp.ge.s32.totalorder %s31, 2
      %s33 = scalar_select %p32, 0, %s31
      %s35 = sadd.s32 %s34, 1
      %p38 = scmp.eq.s32.totalorder %s14, 1
      %p39 = scmp.ne.s32.totalorder %s34, %s36
      %p40 = scmp.eq.s32.totalorder %s14, 0
      %p41 = por %p39, %p40
      %p42 = scmp.ne.s32.totalorder %s34, %s36
      %p43 = scmp.eq.s32.totalorder %s19, 1
      %p44 = por %p42, %p43
      %p45 = scmp.ne.s32.totalorder %s36, %s37
      %p46 = scmp.eq.s32.totalorder %s19, 0
      %p47 = por %p45, %p46
      %p48 = scmp.ne.s32.totalorder %s36, %s37
      %p49 = scmp.eq.s32.totalorder %s20, 1
      %p50 = por %p48, %p49
      %p52 = scmp.ne.s32.totalorder %s37, %s51
      %p53 = scmp.eq.s32.totalorder %s20, 0
      %p54 = por %p52, %p53
      %s55 = ssub.s32 %s21, %s33
      %s56 = ssub.s32 %s22, %s29
      %s57 = sor.u32 %s55, %s56
      %p58 = scmp.eq.s32.totalorder %s57, 0
      %s60 = sadd.s32 %s59, 1
      %s61 = scalar_select %p58, %s59, %s60
      %p64 = pneg %p58
      %p65 = scmp.eq.s32.totalorder %s14, 1
      %p66 = por %p64, %p65
      %p67 = scmp.ne.s32.totalorder %s59, %s62
      %p68 = scmp.eq.s32.totalorder %s14, 0
      %p69 = por %p67, %p68
      %p70 = scmp.ne.s32.totalorder %s59, %s62
      %p71 = scmp.eq.s32.totalorder %s19, 1
      %p72 = por %p70, %p71
      %p73 = scmp.ne.s32.totalorder %s62, %s63
      %p74 = scmp.eq.s32.totalorder %s19, 0
      %p75 = por %p73, %p74
      %p76 = scmp.ne.s32.totalorder %s62, %s63
      %p77 = scmp.eq.s32.totalorder %s20, 1
      %p78 = por %p76, %p77
      %p80 = scmp.ne.s32.totalorder %s63, %s79
      %p81 = scmp.eq.s32.totalorder %s20, 0
      %p82 = por %p80, %p81
      %s83 = ssub.s32 %s21, %s33
      %s84 = ssub.s32 %s22, %s29
      %s85 = sor.u32 %s83, %s84
      %p86 = scmp.eq.s32.totalorder %s85, 0
      %s88 = sadd.s32 %s87, 1
      %s89 = scalar_select %p86, %s87, %s88
      %p92 = pneg %p86
      %p93 = scmp.eq.s32.totalorder %s14, 1
      %p94 = por %p92, %p93
      %p95 = scmp.ne.s32.totalorder %s87, %s90
      %p96 = scmp.eq.s32.totalorder %s14, 0
      %p97 = por %p95, %p96
      %p98 = scmp.ne.s32.totalorder %s87, %s90
      %p99 = scmp.eq.s32.totalorder %s19, 1
      %p100 = por %p98, %p99
      %p101 = scmp.ne.s32.totalorder %s90, %s91
      %p102 = scmp.eq.s32.totalorder %s19, 0
      %p103 = por %p101, %p102
      %p104 = scmp.ne.s32.totalorder %s90, %s91
      %p105 = scmp.eq.s32.totalorder %s20, 1
      %p106 = por %p104, %p105
      %p108 = scmp.ne.s32.totalorder %s91, %s107
      %p109 = scmp.eq.s32.totalorder %s20, 0
      %p110 = por %p108, %p109
      %p111 = scmp.le.s32.totalorder 1, %s14
      %p112 = scmp.lt.s32.totalorder %s14, 3
      %p113 = pnand %p111, %p112
      %p114 = pneg %p113
      // Predicated region
      $region9: #{tpu_custom_call.1} parent=5 // pred_check
        _
      $region10: #{tpu_custom_call.1} parent=5 // pred_check_branch
        %116 = sbr.rel (%p113) target = $region12
      $region11: #{tpu_custom_call.1} parent=5 // pred_region
        %s117 = ssub.s32 %s14, 1
        // Predicated region
        $region13: #{tpu_custom_call.1} parent=11 // pred_check
          %p118 = pneg %p47
        $region14: #{tpu_custom_call.1} parent=11 // pred_check_branch
          %120 = sbr.rel (%p118) target = $region16
        $region15: #{tpu_custom_call.1} parent=11 // pred_region
          _
        $region16: #{tpu_custom_call.1} parent=11 // pred_fallthru
          _
      $region12: #{tpu_custom_call.1} parent=5 // pred_fallthru
        _
      %p121 = scmp.lt.s32.totalorder %s14, 2
      // Predicated region
      $region17: #{tpu_custom_call.1} parent=5 // pred_check
        %p122 = pneg %p121
      $region18: #{tpu_custom_call.1} parent=5 // pred_check_branch
        %124 = sbr.rel (%p122) target = $region20
      $region19: #{tpu_custom_call.1} parent=5 // pred_region
        // Predicated region
        $region21: #{tpu_custom_call.1} parent=19 // pred_check
          %p125 = pneg %p69
        $region22: #{tpu_custom_call.1} parent=19 // pred_check_branch
          %127 = sbr.rel (%p125) target = $region24
        $region23: #{tpu_custom_call.1} parent=19 // pred_region
          %s128 = sand.u32 %s59, 1
          %s129 = scalar_lea.sflag [#allocation3], %s128
          %s130 = sand.u32 %s59, 1
          %s131 = smul.addr %s130, 8
          %s132 = scalar_lea.vmem [#allocation2], %s131
          %s133 = smul.u32 2, %s22
          %135 = vsyncadd %s129, 0
          %s136 = smul.addr %s21, 2
          %s137 = sadd.s32 %s133, %s136
          %s138 = smul.addr %s137, 4
          %s139 = scalar_lea.hbm %s1, %s138
          %s141 = sshll.u32 %s139, 4
          %s142 = int_to_ptr.hbm [resolvable:$true] %s141
          %s143 = sshll.u32 %s132, 4
          %s144 = int_to_ptr.vmem [resolvable:$true] %s143
          %146 = dma.hbm_to_vmem [thread:$0]  %s142, 128, %s144, %s129
        $region24: #{tpu_custom_call.1} parent=19 // pred_fallthru
          _
      $region20: #{tpu_custom_call.1} parent=5 // pred_fallthru
        _
      %p147 = scmp.le.s32.totalorder 1, %s14
      %p148 = scmp.lt.s32.totalorder %s14, 3
      %p149 = pnand %p147, %p148
      %p150 = pneg %p149
      // Predicated region
      $region25: #{tpu_custom_call.1} parent=5 // pred_check
        _
      $region26: #{tpu_custom_call.1} parent=5 // pred_check_branch
        %152 = sbr.rel (%p149) target = $region28
      $region27: #{tpu_custom_call.1} parent=5 // pred_region
        %s153 = ssub.s32 %s14, 1
        %s154 = sand.u32 %s62, 1
        %s155 = scalar_lea.sflag [#allocation3], %s154
        %s156 = sand.u32 %s62, 1
        %s157 = smul.addr %s156, 8
        %s158 = scalar_lea.vmem [#allocation2], %s157
        // Predicated region
        $region29: #{tpu_custom_call.1} parent=27 // pred_check
          %p159 = pneg %p75
        $region30: #{tpu_custom_call.1} parent=27 // pred_check_branch
          %161 = sbr.rel (%p159) target = $region32
        $region31: #{tpu_custom_call.1} parent=27 // pred_region
          %163 = dma.done %s155, 128
        $region32: #{tpu_custom_call.1} parent=27 // pred_fallthru
          _
        %p164 = pneg %p47
        %p165 = pneg %p44
        %s166 = sand.u32 %s62, 1
        %s167 = scalar_lea.sflag [#allocation3], %s166
        %s168 = sand.u32 %s62, 1
        %s169 = smul.addr %s168, 8
        %s170 = scalar_lea.vmem [#allocation2], %s169
        %p171 = pneg %p75
        %p172 = pneg %p72
        %p173 = pneg %p103
        %p174 = pneg %p100
        %s175 = sand.u32 %s90, 1
        %s176 = scalar_lea.sflag [#allocation4], %s175
        %s177 = sand.u32 %s90, 1
        %s178 = smul.addr %s177, 8
        %s179 = scalar_lea.vmem [#allocation5], %s178
        %s180 = smul.u32 2, %s24
        %s181 = smul.u32 2, %s24
        %v182 = vld [vmem:[%s0] sm:$0xf]
        %v183 = vld [vmem:[%s158] sm:$0xff]
        %185 = vset.pattern.permute.xlu0 0
        %186 = vperm.xlu0 %185, %v182
        %v187 = vpop.permute.xlu0 %186
        %190 = vst [vmem:[#allocation1] ss:$2 sm:$0xff] %v183
        %v191 = vld.sshfl [vmem:[#allocation1] sm:$0xff pattern:$0x75316420]
        %v192 = vld.sshfl [vmem:[#allocation1 + $0x8] sm:$0xff pattern:$0x75316420]
        %v195 = vmul.f32 %v187, %v191
        %v196 = vmul.f32 %v187, %v192
        %v199 = vrot.slane %v196, 4
        %vm200 = vcmask 1043456
        %v201 = vsel %vm200, %v195, %v199
        %203 = vst [vmem:[%s179] sm:$0xff] %v201
        %s204 = sand.u32 %s90, 1
        %s205 = scalar_lea.sflag [#allocation4], %s204
        %s206 = sand.u32 %s90, 1
        %s207 = smul.addr %s206, 8
        %s208 = scalar_lea.vmem [#allocation5], %s207
        // Predicated region
        $region33: #{tpu_custom_call.1} parent=27 // pred_check
          %p209 = pneg %p100
        $region34: #{tpu_custom_call.1} parent=27 // pred_check_branch
          %211 = sbr.rel (%p209) target = $region36
        $region35: #{tpu_custom_call.1} parent=27 // pred_region
          %s212 = smul.u32 2, %s24
          %214 = vsyncadd %s205, 0
          %s215 = smul.addr %s23, 2
          %s216 = sadd.s32 %s212, %s215
          %s217 = smul.addr %s216, 4
          %s218 = scalar_lea.hbm %s2, %s217
          %s220 = sshll.u32 %s208, 4
          %s221 = int_to_ptr.vmem [resolvable:$true] %s220
          %s222 = sshll.u32 %s218, 4
          %s223 = int_to_ptr.hbm [resolvable:$true] %s222
          %225 = dma.vmem_to_hbm [thread:$0]  %s221, 128, %s223, %s205
        $region36: #{tpu_custom_call.1} parent=27 // pred_fallthru
          _
      $region28: #{tpu_custom_call.1} parent=5 // pred_fallthru
        _
      %p226 = scmp.le.s32.totalorder 2, %s14
      // Predicated region
      $region37: #{tpu_custom_call.1} parent=5 // pred_check
        %p227 = pneg %p226
      $region38: #{tpu_custom_call.1} parent=5 // pred_check_branch
        %229 = sbr.rel (%p227) target = $region40
      $region39: #{tpu_custom_call.1} parent=5 // pred_region
        %s230 = ssub.s32 %s14, 2
        // Predicated region
        $region41: #{tpu_custom_call.1} parent=39 // pred_check
          %p231 = pneg %p106
        $region42: #{tpu_custom_call.1} parent=39 // pred_check_branch
          %233 = sbr.rel (%p231) target = $region44
        $region43: #{tpu_custom_call.1} parent=39 // pred_region
          %s234 = sand.u32 %s91, 1
          %s235 = scalar_lea.sflag [#allocation4], %s234
          %s236 = sand.u32 %s91, 1
          %s237 = smul.addr %s236, 8
          %s238 = scalar_lea.vmem [#allocation5], %s237
          %240 = dma.done %s235, 128
        $region44: #{tpu_custom_call.1} parent=39 // pred_fallthru
          _
      $region40: #{tpu_custom_call.1} parent=5 // pred_fallthru
        _
    $region6: #{tpu_custom_call.1} parent=1 // loop_footer
      %s18 = sadd.s32 1, %s14
    $region7: #{tpu_custom_call.1} parent=1 // loop_footer_branch
      %13 = sbr.rel target = $region3
    $region8: #{tpu_custom_call.1} parent=1 // loop_exit
      _
    %241 = vsyncpa [#allocation3], 1
    %s242 = scalar_lea.sflag [#allocation3], 1
    %243 = vsyncpa %s242, 1
    %244 = vsyncpa [#allocation4], 1
    %s245 = scalar_lea.sflag [#allocation4], 1
    %246 = vsyncpa %s245, 1

</llo_original>
